<compile_context>
chip_gen: v5e
topology: v5e:2x2
jax: 0.10.0
libtpu: 0.0.40
codegen_flags: <defaults>
</compile_context>

<pallas_src>
import math

import jax
import jax.numpy as jnp
from jax.experimental import pallas as pl
from jax.experimental.pallas import tpu as pltpu


def _l_grammar_kernel(t_ref, x_ref, ctx_ref, nfix_ref, den_ref, p_ref, m_ref,
                      upd_ref, ctx_out_ref, acc_ref):
    step = pl.program_id(0)

    @pl.when(step == 0)
    def _init():
        acc_ref[...] = jnp.zeros_like(acc_ref)

    # Streamed O(N^3) term: one MXU matmul per step over a contiguous (TK, N)
    # weight tile.  acc[b, j] += P[:, k-tile] @ M[k-tile, :]
    acc_ref[...] += jnp.dot(p_ref[...], m_ref[...],
                            preferred_element_type=jnp.float32)

    @pl.when(step == pl.num_programs(0) - 1)
    def _finalize():
        t = t_ref[0]
        # upd = (xs*W_hat - dot_fix - big) / (W_hat - row_sum); numerator fixed
        # part and denominator were folded in the wrapper (num_fixed / denom).
        upd_ref[...] = (nfix_ref[...] - acc_ref[...]) / den_ref[...]
        ctx_out_ref[...] = (ctx_ref[...] * (t / (t + 1.0))
                            + x_ref[...] * (1.0 / (t + 1.0)))


def _round_up(x, m):
    return ((x + m - 1) // m) * m


def _vmem_budget():
    """Returns (per-tile target bytes, vmem_limit_bytes), sized per generation."""
    try:
        cap = getattr(pltpu.get_tpu_info(), "vmem_capacity_bytes", 64 << 20)
    except Exception:
        cap = 64 << 20
    if cap >= (100 << 20):            # v5e / v6e: 128 MiB physical VMEM
        return 16 << 20, 64 << 20
    return 8 << 20, 40 << 20          # v7x (64 MiB per TC) or unknown: conservative


def _choose_tk(N, B, itemsize, target_bytes):
    """Tile width TK along the flat N^2 contraction axis.

    TK is a multiple of 128 (lane dim of the streamed (B, TK) P tile; also a
    multiple of 8 for the (TK, N) M tile sublane dim) and sized so one M tile
    plus one P tile stays under target_bytes.  The contraction axis is padded
    up to n_steps*TK with zeros (exact), so no oversized single-tile fallback.
    """
    K = N * N
    per_row = (N + B) * itemsize                       # bytes per flat-K row (M + P)
    tk_cap = max(128, (target_bytes // per_row) // 128 * 128)
    tk_cap = min(tk_cap, _round_up(K, 128))
    n_steps = max(1, math.ceil(K / tk_cap))
    tk = _round_up(math.ceil(K / n_steps), 128)
    return tk, n_steps, n_steps * tk


def l_grammar_forward(X, context, t, E, A, scale, Wc, bc, *,
                      stream_dtype=jnp.float32):
    """L_grammar.forward (combine_walks=False, context_L=True, e_init=False).

    Tiny O(B*N^2) folds run once in plain XLA; the O(N^3) context-weight stream
    runs through the Pallas kernel as a tiled matmul with an f32 accumulator.
    """
    f32 = jnp.float32
    X = jnp.asarray(X, f32)
    context = jnp.asarray(context, f32)
    E = jnp.asarray(E, f32)
    A = jnp.asarray(A, f32)
    scale = jnp.asarray(scale, f32)
    Wc = jnp.asarray(Wc, f32)
    bc = jnp.asarray(bc, f32)

    B, N = X.shape
    K = N * N
    Wc3 = Wc.reshape(N, N, N)          # [j, i, k]
    bcNN = bc.reshape(N, N)            # [j, i]

    xs = X * scale[None, :]            # scale folded once (grid-invariant)

    # ---- small folds: computed once, passed to the kernel as (B, N) operands ----
    col_sum = context @ Wc3.sum(axis=0).T + (bcNN.sum(axis=0) + E.sum(axis=0))[None]
    W_hat = col_sum @ A                                          # (B, N)
    row_sum = context @ Wc3.sum(axis=1).T + (bcNN.sum(axis=1) + E.sum(axis=1))[None]
    dot_fix = xs @ (E + bcNN).T                                  # sum_i xs_i*(E+bc)[j,i]
    num_fixed = xs * W_hat - dot_fix                             # fixed numerator part
    denom = W_hat - row_sum                                      # unnormalized L row sums

    # ---- streamed O(N^3) term, outer-product form ----
    #   big[b, j] = sum_{i,k} xs[b,i]*ctx[b,k]*Wc[j*N+i, k] = (P @ M)[b, j]
    P = (xs[:, :, None] * context[:, None, :]).reshape(B, K)     # (B, N^2)
    M = jnp.transpose(Wc3, (1, 2, 0)).reshape(K, N)              # (N^2, N)

    itemsize = jnp.dtype(stream_dtype).itemsize
    target_bytes, vmem_limit = _vmem_budget()
    TK, n_steps, K_pad = _choose_tk(N, B, itemsize, target_bytes)
    if K_pad > K:                      # zero-pad the contraction axis (exact)
        P = jnp.pad(P, ((0, 0), (0, K_pad - K)))
        M = jnp.pad(M, ((0, K_pad - K), (0, 0)))
    P = P.astype(stream_dtype)
    M = M.astype(stream_dtype)

    t_arr = jnp.asarray([t], dtype=f32)

    def resident(shape):
        return pl.BlockSpec(shape, lambda k: (0, 0))

    upd, ctx_new = pl.pallas_call(
        _l_grammar_kernel,
        grid=(n_steps,),
        in_specs=[
            pl.BlockSpec(memory_space=pltpu.MemorySpace.SMEM),   # t scalar
            resident((B, N)),                                    # X
            resident((B, N)),                                    # context
            resident((B, N)),                                    # num_fixed
            resident((B, N)),                                    # denom
            pl.BlockSpec((B, TK), lambda k: (0, k)),             # P (streamed)
            pl.BlockSpec((TK, N), lambda k: (k, 0)),             # M (streamed N^3 weight)
        ],
        out_specs=(resident((B, N)), resident((B, N))),
        out_shape=(jax.ShapeDtypeStruct((B, N), f32),
                   jax.ShapeDtypeStruct((B, N), f32)),
        scratch_shapes=[pltpu.VMEM((B, N), jnp.float32)],
        compiler_params=pltpu.CompilerParams(
            dimension_semantics=("arbitrary",),   # grid axis carries the accumulator
            vmem_limit_bytes=vmem_limit),
    )(t_arr, X, context, num_fixed, denom, P, M)
    return upd, ctx_new


def ref_forward(X, context, t, E, A, scale, Wc, bc):
    """Pure-JAX reference mirroring the PyTorch forward (combine_walks=False, context_L=True)."""
    B, N = X.shape
    adjust = (context @ Wc.T + bc).reshape(B, N, N)
    W_new = adjust + E[None]
    W_hat = jnp.matmul(W_new, A[None]).sum(axis=-2)
    L = W_hat[:, :, None] * jnp.eye(N, dtype=X.dtype)[None] - W_new
    L = L / L.sum(axis=-1, keepdims=True)
    ctx_new = context * t / (t + 1.0) + X / (t + 1.0)
    L_T = scale[None, :, None] * jnp.swapaxes(L, -1, -2)
    upd = jnp.matmul(X[:, None, :], L_T).squeeze()
    return upd, ctx_new


if __name__ == "__main__":
    B, N = 4, 16
    key = jax.random.PRNGKey(0)
    k1, k2, k3, k4, k5 = jax.random.split(key, 5)

    X = jax.random.uniform(k1, (B, N), dtype=jnp.float32)
    context = jax.random.uniform(k2, (B, N), dtype=jnp.float32)
    t = 3.0

    # Parameters (deterministic, synthetic):
    E = jax.random.uniform(k3, (N, N), dtype=jnp.float32)       # e_init=False -> torch.rand
    idx = jnp.arange(N)
    # adjacency: each node points to itself and the next 3 (keeps L row sums away from zero)
    A = (((idx[None, :] - idx[:, None]) % N) < 4).astype(jnp.float32)
    scale = jnp.ones((N,), dtype=jnp.float32)                   # torch.ones(N)
    # NOTE: the PyTorch module zero-inits context_layer; small nonzero deterministic
    # values are used here so the context-adjustment (streamed) path is exercised.
    Wc = 0.01 * jax.random.normal(k4, (N * N, N), dtype=jnp.float32)
    bc = 0.01 * jax.random.normal(k5, (N * N,), dtype=jnp.float32)

    upd_ref, ctx_ref = ref_forward(X, context, t, E, A, scale, Wc, bc)

    # f32 weight stream (default): tight tolerance.
    upd, ctx_new = l_grammar_forward(X, context, t, E, A, scale, Wc, bc)
    jax.block_until_ready((upd, ctx_new))
    assert upd.shape == (B, N) and ctx_new.shape == (B, N)
    assert jnp.allclose(upd, upd_ref, rtol=1e-4, atol=1e-5), \
        float(jnp.max(jnp.abs(upd - upd_ref)))
    assert jnp.allclose(ctx_new, ctx_ref, rtol=1e-4, atol=1e-5)

    # bf16 weight stream (HBM-bandwidth optimization, f32 accumulation): looser tolerance.
    upd_bf, ctx_bf = l_grammar_forward(X, context, t, E, A, scale, Wc, bc,
                                       stream_dtype=jnp.bfloat16)
    jax.block_until_ready((upd_bf, ctx_bf))
    assert jnp.allclose(upd_bf, upd_ref, rtol=2e-2, atol=2e-3), \
        float(jnp.max(jnp.abs(upd_bf - upd_ref)))
    assert jnp.allclose(ctx_bf, ctx_ref, rtol=1e-4, atol=1e-5)

    print("KERNEL_OK")
</pallas_src>

<mosaic_0001>
module attributes {stable_mosaic.version = 11 : i64} {
  func.func @_l_grammar_kernel(%arg0: i32, %arg1: memref<1xf32, #tpu.memory_space<smem>>, %arg2: memref<4x16xf32, #tpu.memory_space<vmem>>, %arg3: memref<4x16xf32, #tpu.memory_space<vmem>>, %arg4: memref<4x16xf32, #tpu.memory_space<vmem>>, %arg5: memref<4x16xf32, #tpu.memory_space<vmem>>, %arg6: memref<4x256xf32, #tpu.memory_space<vmem>>, %arg7: memref<256x16xf32, #tpu.memory_space<vmem>>, %arg8: memref<4x16xf32, #tpu.memory_space<vmem>>, %arg9: memref<4x16xf32, #tpu.memory_space<vmem>>, %arg10: memref<4x16xf32, #tpu.memory_space<vmem>>) attributes {dimension_semantics = [#tpu.dimension_semantics<arbitrary>], iteration_bounds = array<i64: 1>, scalar_prefetch = 0 : i64, scratch_operands = 1 : i64, tpu.core_type = #tpu.core_type<tc>, window_params = [{transform_indices = @transform_0, window_bounds = array<i64: 1>}, {pipeline_mode = #tpu.pipeline_mode<synchronous>, transform_indices = @transform_1, window_bounds = array<i64: 4, 16>}, {pipeline_mode = #tpu.pipeline_mode<synchronous>, transform_indices = @transform_2, window_bounds = array<i64: 4, 16>}, {pipeline_mode = #tpu.pipeline_mode<synchronous>, transform_indices = @transform_3, window_bounds = array<i64: 4, 16>}, {pipeline_mode = #tpu.pipeline_mode<synchronous>, transform_indices = @transform_4, window_bounds = array<i64: 4, 16>}, {transform_indices = @transform_5, window_bounds = array<i64: 4, 256>}, {transform_indices = @transform_6, window_bounds = array<i64: 256, 16>}, {pipeline_mode = #tpu.pipeline_mode<synchronous>, transform_indices = @transform_7, window_bounds = array<i64: 4, 16>}, {pipeline_mode = #tpu.pipeline_mode<synchronous>, transform_indices = @transform_8, window_bounds = array<i64: 4, 16>}]} {
    %c0_i32 = arith.constant 0 : i32
    %0 = arith.cmpi eq, %arg0, %c0_i32 : i32
    %1 = arith.extui %0 : i1 to i32
    %c0_i32_0 = arith.constant 0 : i32
    %2 = arith.cmpi ne, %1, %c0_i32_0 : i32
    scf.if %2 {
      %cst_10 = arith.constant 0.000000e+00 : f32
      %12 = vector.broadcast %cst_10 : f32 to vector<4x16xf32>
      %c0_11 = arith.constant 0 : index
      %c0_12 = arith.constant 0 : index
      %13 = vector.load %arg10[%c0_11, %c0_12] : memref<4x16xf32, #tpu.memory_space<vmem>>, vector<4x16xf32>
      tpu.vector_store %arg10[%c0_11, %c0_12], %12 {strides = array<i32>} : memref<4x16xf32, #tpu.memory_space<vmem>>, vector<4x16xf32>,
    } else {
    }
    %c0 = arith.constant 0 : index
    %c0_1 = arith.constant 0 : index
    %3 = vector.load %arg10[%c0, %c0_1] : memref<4x16xf32, #tpu.memory_space<vmem>>, vector<4x16xf32>
    %c0_2 = arith.constant 0 : index
    %c0_3 = arith.constant 0 : index
    %4 = vector.load %arg6[%c0_2, %c0_3] : memref<4x256xf32, #tpu.memory_space<vmem>>, vector<4x256xf32>
    %c0_4 = arith.constant 0 : index
    %c0_5 = arith.constant 0 : index
    %5 = vector.load %arg7[%c0_4, %c0_5] : memref<256x16xf32, #tpu.memory_space<vmem>>, vector<256x16xf32>
    %cst = arith.constant dense<0.000000e+00> : vector<4x16xf32>
    %6 = tpu.matmul %4, %5, %cst {dimension_numbers = #tpu.dot_dimension_numbers<[1], [0], [0], [1], [0, 0, 1, 1], [], []>} : vector<4x256xf32>, vector<256x16xf32>, vector<4x16xf32> -> vector<4x16xf32>
    %7 = arith.addf %3, %6 : vector<4x16xf32>
    %c0_6 = arith.constant 0 : index
    %c0_7 = arith.constant 0 : index
    %8 = vector.load %arg10[%c0_6, %c0_7] : memref<4x16xf32, #tpu.memory_space<vmem>>, vector<4x16xf32>
    tpu.vector_store %arg10[%c0_6, %c0_7], %7 {strides = array<i32>} : memref<4x16xf32, #tpu.memory_space<vmem>>, vector<4x16xf32>,
    %c0_i32_8 = arith.constant 0 : i32
    %9 = arith.cmpi eq, %arg0, %c0_i32_8 : i32
    %10 = arith.extui %9 : i1 to i32
    %c0_i32_9 = arith.constant 0 : i32
    %11 = arith.cmpi ne, %10, %c0_i32_9 : i32
    scf.if %11 {
      %c0_10 = arith.constant 0 : index
      %12 = memref.load %arg1[%c0_10] : memref<1xf32, #tpu.memory_space<smem>>
      %c0_11 = arith.constant 0 : index
      %c0_12 = arith.constant 0 : index
      %13 = vector.load %arg4[%c0_11, %c0_12] : memref<4x16xf32, #tpu.memory_space<vmem>>, vector<4x16xf32>
      %c0_13 = arith.constant 0 : index
      %c0_14 = arith.constant 0 : index
      %14 = vector.load %arg10[%c0_13, %c0_14] : memref<4x16xf32, #tpu.memory_space<vmem>>, vector<4x16xf32>
      %15 = arith.subf %13, %14 : vector<4x16xf32>
      %c0_15 = arith.constant 0 : index
      %c0_16 = arith.constant 0 : index
      %16 = vector.load %arg5[%c0_15, %c0_16] : memref<4x16xf32, #tpu.memory_space<vmem>>, vector<4x16xf32>
      %17 = arith.divf %15, %16 : vector<4x16xf32>
      %c0_17 = arith.constant 0 : index
      %c0_18 = arith.constant 0 : index
      %18 = vector.load %arg8[%c0_17, %c0_18] : memref<4x16xf32, #tpu.memory_space<vmem>>, vector<4x16xf32>
      tpu.vector_store %arg8[%c0_17, %c0_18], %17 {strides = array<i32>} : memref<4x16xf32, #tpu.memory_space<vmem>>, vector<4x16xf32>,
      %c0_19 = arith.constant 0 : index
      %c0_20 = arith.constant 0 : index
      %19 = vector.load %arg3[%c0_19, %c0_20] : memref<4x16xf32, #tpu.memory_space<vmem>>, vector<4x16xf32>
      %cst_21 = arith.constant 1.000000e+00 : f32
      %20 = arith.addf %12, %cst_21 : f32
      %21 = arith.divf %12, %20 : f32
      %22 = vector.broadcast %21 : f32 to vector<4x16xf32>
      %23 = arith.mulf %19, %22 : vector<4x16xf32>
      %c0_22 = arith.constant 0 : index
      %c0_23 = arith.constant 0 : index
      %24 = vector.load %arg2[%c0_22, %c0_23] : memref<4x16xf32, #tpu.memory_space<vmem>>, vector<4x16xf32>
      %cst_24 = arith.constant 1.000000e+00 : f32
      %25 = arith.addf %12, %cst_24 : f32
      %cst_25 = arith.constant 1.000000e+00 : f32
      %26 = arith.divf %cst_25, %25 : f32
      %27 = vector.broadcast %26 : f32 to vector<4x16xf32>
      %28 = arith.mulf %24, %27 : vector<4x16xf32>
      %29 = arith.addf %23, %28 : vector<4x16xf32>
      %c0_26 = arith.constant 0 : index
      %c0_27 = arith.constant 0 : index
      %30 = vector.load %arg9[%c0_26, %c0_27] : memref<4x16xf32, #tpu.memory_space<vmem>>, vector<4x16xf32>
      tpu.vector_store %arg9[%c0_26, %c0_27], %29 {strides = array<i32>} : memref<4x16xf32, #tpu.memory_space<vmem>>, vector<4x16xf32>,
    } else {
    }
    return
  }
  func.func @transform_0(%arg0: i32) -> i32 {
    %c0_i32 = arith.constant 0 : i32
    %c0_i32_0 = arith.constant 0 : i32
    return %c0_i32 : i32
  }
  func.func @transform_1(%arg0: i32) -> (i32, i32) {
    %c0_i32 = arith.constant 0 : i32
    %c0_i32_0 = arith.constant 0 : i32
    %c0_i32_1 = arith.constant 0 : i32
    return %c0_i32, %c0_i32_0 : i32, i32
  }
  func.func @transform_2(%arg0: i32) -> (i32, i32) {
    %c0_i32 = arith.constant 0 : i32
    %c0_i32_0 = arith.constant 0 : i32
    %c0_i32_1 = arith.constant 0 : i32
    return %c0_i32, %c0_i32_0 : i32, i32
  }
  func.func @transform_3(%arg0: i32) -> (i32, i32) {
    %c0_i32 = arith.constant 0 : i32
    %c0_i32_0 = arith.constant 0 : i32
    %c0_i32_1 = arith.constant 0 : i32
    return %c0_i32, %c0_i32_0 : i32, i32
  }
  func.func @transform_4(%arg0: i32) -> (i32, i32) {
    %c0_i32 = arith.constant 0 : i32
    %c0_i32_0 = arith.constant 0 : i32
    %c0_i32_1 = arith.constant 0 : i32
    return %c0_i32, %c0_i32_0 : i32, i32
  }
  func.func @transform_5(%arg0: i32) -> (i32, i32) {
    %c0_i32 = arith.constant 0 : i32
    %c0_i32_0 = arith.constant 0 : i32
    return %c0_i32, %arg0 : i32, i32
  }
  func.func @transform_6(%arg0: i32) -> (i32, i32) {
    %c0_i32 = arith.constant 0 : i32
    %c0_i32_0 = arith.constant 0 : i32
    return %arg0, %c0_i32 : i32, i32
  }
  func.func @transform_7(%arg0: i32) -> (i32, i32) {
    %c0_i32 = arith.constant 0 : i32
    %c0_i32_0 = arith.constant 0 : i32
    %c0_i32_1 = arith.constant 0 : i32
    return %c0_i32, %c0_i32_0 : i32, i32
  }
  func.func @transform_8(%arg0: i32) -> (i32, i32) {
    %c0_i32 = arith.constant 0 : i32
    %c0_i32_0 = arith.constant 0 : i32
    %c0_i32_1 = arith.constant 0 : i32
    return %c0_i32, %c0_i32_0 : i32, i32
  }
}

</mosaic_0001>

<llo_original>
// kernel: tpu_custom_call.1
$region0: #{tpu_custom_call.1}
  #allocation0 [shape = 'u32[]', space=smem, size = 0x4, offset = 0x4, fixed_abs, tag = 'smem constant byte address 0x4 - core index']
  #allocation1 [shape = 'u32[72,128]{1,0:T(1,128)}', space=vmem, size = 0x9000, scoped, tag = 'internal scratch']
  #allocation2 [shape = 'f32[4,16]{1,0:T(4,128)}', space=vmem, size = 0x800, scoped, tag = 'scratch operand']
  #allocation3 [shape = 'f32[1]{0:T(128)S(6)}', space=smem, size = 0x200, scoped, tag = 'scoped memory for tpu_custom_call.1']
  %s0 = inlined_call_operand.<no memory space> [shape: f32[1], index: 0, kind: input, shape index: {}]
  %s1 = inlined_call_operand.vmem [shape: f32[4,16], index: 1, kind: input, shape index: {}]
  %s2 = inlined_call_operand.vmem [shape: f32[4,16], index: 2, kind: input, shape index: {}]
  %s3 = inlined_call_operand.vmem [shape: f32[4,16], index: 3, kind: input, shape index: {}]
  %s4 = inlined_call_operand.vmem [shape: f32[4,16], index: 4, kind: input, shape index: {}]
  %s5 = inlined_call_operand.vmem [shape: f32[4,256], index: 5, kind: input, shape index: {}]
  %s6 = inlined_call_operand.vmem [shape: f32[256,16], index: 6, kind: input, shape index: {}]
  %s7 = inlined_call_operand.hbm [shape: f32[4,16], index: 7, kind: output, shape index: {0}]
  %s8 = inlined_call_operand.hbm [shape: f32[4,16], index: 8, kind: output, shape index: {1}]
  %9 = xla_tuple %s7, %s8
  %s10 = sld [smem:[#allocation0]]
  $region54: #{tpu_custom_call.1} parent=0
    _
  %s12 = ssub.s32 1, %s10
  %s13 = scalar_select 0, %s12, %s10
  %14 = sst [smem:[#allocation3]] %s0
  $region1: #{tpu_custom_call.1} parent=0
    #allocation4 [shape = 'u8[2048]{0}', space=vmem, size = 0x800, scoped, tag = 'output window, operand 0, single buffered']
    #allocation5 [shape = 's32[1]{0}', space=sflag, size = 0x4, scoped, tag = 'scoped memory for tpu_custom_call.1']
    #allocation6 [shape = 'u8[2048]{0}', space=vmem, size = 0x800, scoped, tag = 'output window, operand 1, single buffered']
    #allocation7 [shape = 's32[1]{0}', space=sflag, size = 0x4, scoped, tag = 'scoped memory for tpu_custom_call.1']
    %15 = vsyncpa [#allocation5], 0
    %16 = vsyncpa [#allocation7], 0
    // Predicated region
    $region2: #{tpu_custom_call.1} parent=1 // pred_check
      _
    $region3: #{tpu_custom_call.1} parent=1 // pred_check_branch
      %18 = sbr.rel (0) target = $region5
    $region4: #{tpu_custom_call.1} parent=1 // pred_region
      _
    $region5: #{tpu_custom_call.1} parent=1 // pred_fallthru
      _
    // Predicated region
    $region6: #{tpu_custom_call.1} parent=1 // pred_check
      _
    $region7: #{tpu_custom_call.1} parent=1 // pred_check_branch
      %20 = sbr.rel (0) target = $region9
    $region8: #{tpu_custom_call.1} parent=1 // pred_region
      _
    $region9: #{tpu_custom_call.1} parent=1 // pred_fallthru
      _
    // Predicated region
    $region10: #{tpu_custom_call.1} parent=1 // pred_check
      _
    $region11: #{tpu_custom_call.1} parent=1 // pred_check_branch
      %22 = sbr.rel (0) target = $region13
    $region12: #{tpu_custom_call.1} parent=1 // pred_region
      _
    $region13: #{tpu_custom_call.1} parent=1 // pred_fallthru
      _
    // Predicated region
    $region14: #{tpu_custom_call.1} parent=1 // pred_check
      _
    $region15: #{tpu_custom_call.1} parent=1 // pred_check_branch
      %24 = sbr.rel (0) target = $region17
    $region16: #{tpu_custom_call.1} parent=1 // pred_region
      _
    $region17: #{tpu_custom_call.1} parent=1 // pred_fallthru
      _
    // Predicated region
    $region18: #{tpu_custom_call.1} parent=1 // pred_check
      _
    $region19: #{tpu_custom_call.1} parent=1 // pred_check_branch
      %26 = sbr.rel (0) target = $region21
    $region20: #{tpu_custom_call.1} parent=1 // pred_region
      _
    $region21: #{tpu_custom_call.1} parent=1 // pred_fallthru
      _
    // Predicated region
    $region22: #{tpu_custom_call.1} parent=1 // pred_check
      _
    $region23: #{tpu_custom_call.1} parent=1 // pred_check_branch
      %28 = sbr.rel (0) target = $region25
    $region24: #{tpu_custom_call.1} parent=1 // pred_region
      _
    $region25: #{tpu_custom_call.1} parent=1 // pred_fallthru
      _
    // Predicated region
    $region26: #{tpu_custom_call.1} parent=1 // pred_check
      _
    $region27: #{tpu_custom_call.1} parent=1 // pred_check_branch
      %30 = sbr.rel (0) target = $region29
    $region28: #{tpu_custom_call.1} parent=1 // pred_region
      _
    $region29: #{tpu_custom_call.1} parent=1 // pred_fallthru
      _
    %p31 = scmp.eq.s32.totalorder 0, 0
    // Predicated region
    $region30: #{tpu_custom_call.1} parent=1 // pred_check
      %p32 = pneg %p31
    $region31: #{tpu_custom_call.1} parent=1 // pred_check_branch
      %34 = sbr.rel (%p32) target = $region33
    $region32: #{tpu_custom_call.1} parent=1 // pred_region
      %vm35 = vcmask 125952
      %36 = vst.msk [vmem:[#allocation2] sm:$0xf] %vm35, 0.0
    $region33: #{tpu_custom_call.1} parent=1 // pred_fallthru
      _
    %v37 = vld [vmem:[#allocation2] sm:$0xf]
    %v38 = vld [vmem:[%s5] sm:$0xff]
    %v39 = vld [vmem:[%s6] sm:$0xff]
    %v40 = vld [vmem:[%s6 + $0x8] sm:$0xff]
    %v41 = vld [vmem:[%s6 + $0x10] sm:$0xff]
    %v42 = vld [vmem:[%s6 + $0x18] sm:$0xff]
    %v43 = vld [vmem:[%s6 + $0x20] sm:$0xff]
    %v44 = vld [vmem:[%s6 + $0x28] sm:$0xff]
    %v45 = vld [vmem:[%s6 + $0x30] sm:$0xff]
    %v46 = vld [vmem:[%s6 + $0x38] sm:$0xff]
    %v47 = vld [vmem:[%s6 + $0x40] sm:$0xff]
    %v48 = vld [vmem:[%s6 + $0x48] sm:$0xff]
    %v49 = vld [vmem:[%s6 + $0x50] sm:$0xff]
    %v50 = vld [vmem:[%s6 + $0x58] sm:$0xff]
    %v51 = vld [vmem:[%s6 + $0x60] sm:$0xff]
    %v52 = vld [vmem:[%s6 + $0x68] sm:$0xff]
    %v53 = vld [vmem:[%s6 + $0x70] sm:$0xff]
    %v54 = vld [vmem:[%s6 + $0x78] sm:$0xff]
    %v55 = vld [vmem:[%s6 + $0x80] sm:$0xff]
    %v56 = vld [vmem:[%s6 + $0x88] sm:$0xff]
    %v57 = vld [vmem:[%s6 + $0x90] sm:$0xff]
    %v58 = vld [vmem:[%s6 + $0x98] sm:$0xff]
    %v59 = vld [vmem:[%s6 + $0xa0] sm:$0xff]
    %v60 = vld [vmem:[%s6 + $0xa8] sm:$0xff]
    %v61 = vld [vmem:[%s6 + $0xb0] sm:$0xff]
    %v62 = vld [vmem:[%s6 + $0xb8] sm:$0xff]
    %v63 = vld [vmem:[%s6 + $0xc0] sm:$0xff]
    %v64 = vld [vmem:[%s6 + $0xc8] sm:$0xff]
    %v65 = vld [vmem:[%s6 + $0xd0] sm:$0xff]
    %v66 = vld [vmem:[%s6 + $0xd8] sm:$0xff]
    %v67 = vld [vmem:[%s6 + $0xe0] sm:$0xff]
    %v68 = vld [vmem:[%s6 + $0xe8] sm:$0xff]
    %v69 = vld [vmem:[%s6 + $0xf0] sm:$0xff]
    %v70 = vld [vmem:[%s6 + $0xf8] sm:$0xff]
    %72 = vst [vmem:[#allocation1] ss:$2 sm:$0xff] %v38
    %v73 = vld.sshfl [vmem:[#allocation1] sm:$0xff pattern:$0x75316420]
    %v74 = vld.sshfl [vmem:[#allocation1 + $0x8] sm:$0xff pattern:$0x75316420]
    %77 = vmatpush.msra.mxu0 %v54
    %78 = vmatpush.msra.mxu0 %v53
    %79 = vmatpush.msra.mxu0 %v52
    %80 = vmatpush.msra.mxu0 %v51
    %81 = vmatpush.msra.mxu0 %v50
    %82 = vmatpush.msra.mxu0 %v49
    %83 = vmatpush.msra.mxu0 %v48
    %84 = vmatpush.msra.mxu0 %v47
    %85 = vmatpush.msra.mxu0 %v46
    %86 = vmatpush.msra.mxu0 %v45
    %87 = vmatpush.msra.mxu0 %v44
    %88 = vmatpush.msra.mxu0 %v43
    %89 = vmatpush.msra.mxu0 %v42
    %90 = vmatpush.msra.mxu0 %v41
    %91 = vmatpush.msra.mxu0 %v40
    %92 = vmatpush.msra.mxu0 %v39
    %93 = vmatmul.f32.gmra.mxu0 %v73
    %v94 = vpop.f32.mrf.mxu0
    %v95 = vadd.f32 0.0, %v94
    %96 = vdwg.mxu0
    %97 = vmatpush.msra.mxu0 %v70
    %98 = vmatpush.msra.mxu0 %v69
    %99 = vmatpush.msra.mxu0 %v68
    %100 = vmatpush.msra.mxu0 %v67
    %101 = vmatpush.msra.mxu0 %v66
    %102 = vmatpush.msra.mxu0 %v65
    %103 = vmatpush.msra.mxu0 %v64
    %104 = vmatpush.msra.mxu0 %v63
    %105 = vmatpush.msra.mxu0 %v62
    %106 = vmatpush.msra.mxu0 %v61
    %107 = vmatpush.msra.mxu0 %v60
    %108 = vmatpush.msra.mxu0 %v59
    %109 = vmatpush.msra.mxu0 %v58
    %110 = vmatpush.msra.mxu0 %v57
    %111 = vmatpush.msra.mxu0 %v56
    %112 = vmatpush.msra.mxu0 %v55
    %113 = vmatmul.f32.gmra.mxu0 %v74
    %v114 = vpop.f32.mrf.mxu0
    %v115 = vadd.f32 %v95, %v114
    %116 = vdwg.mxu0
    %v117 = vadd.f32 %v37, %v115
    %vm118 = vcmask 125952
    %119 = vst.msk [vmem:[#allocation2] sm:$0xf] %vm118, %v117
    // Predicated region
    $region34: #{tpu_custom_call.1} parent=1 // pred_check
      %p120 = pneg %p31
    $region35: #{tpu_custom_call.1} parent=1 // pred_check_branch
      %122 = sbr.rel (%p120) target = $region37
    $region36: #{tpu_custom_call.1} parent=1 // pred_region
      %s123 = sld [smem:[#allocation3]]
      %v124 = vld [vmem:[%s3] sm:$0xf]
      %v125 = vld [vmem:[#allocation2] sm:$0xf]
      %v126 = vsub.f32 %v124, %v125
      %v127 = vld [vmem:[%s4] sm:$0xf]
      %v128 = vrcp.pop %v127
      %v129 = vmul.f32 %v127, %v128
      %v130 = vsub.f32 1.0, %v129
      %v131 = vmul.f32 %v128, %v130
      %v132 = vadd.f32 %v128, %v131
      %vm133 = vweird.f32 %v127
      %vm134 = vweird.f32 %v128
      %vm135 = vmor %vm133, %vm134
      %v136 = vsel %vm135, %v128, %v132
      %v137 = vand.u32 2147483647, %v127
      %vm138 = vcmp.eq.f32.partialorder %v137, 8.507059e+37
      %v139 = vand.u32 %v127, 2147483648
      %v140 = vor.u32 1.1754944e-38, %v139
      %v141 = vsel %vm138, %v140, %v136
      %v142 = vmul.f32 %v126, %v141
      %143 = vst.msk [vmem:[#allocation4] sm:$0xf] %vm118, %v142
      %v144 = vld [vmem:[%s2] sm:$0xf]
      %s145 = sadd.f32 %s123, 1.0
      %v146 = vstv %s145
      %v147 = vrcp.pop %v146
      %v148 = vmul.f32 %v146, %v147
      %v149 = vsub.f32 1.0, %v148
      %v150 = vmul.f32 %v147, %v149
      %v151 = vadd.f32 %v147, %v150
      %vm152 = vweird.f32 %v146
      %vm153 = vweird.f32 %v147
      %vm154 = vmor %vm152, %vm153
      %v155 = vsel %vm154, %v147, %v151
      %v156 = vand.u32 2147483647, %v146
      %vm157 = vcmp.eq.f32.partialorder %v156, 8.507059e+37
      %v158 = vand.u32 %v146, 2147483648
      %v159 = vor.u32 1.1754944e-38, %v158
      %v160 = vsel %vm157, %v159, %v155
      %s161 = vtos %v160
      %s162 = smul.f32 %s123, %s161
      %v163 = vstv %s162
      %v164 = vmul.f32 %v144, %v163
      %v165 = vld [vmem:[%s1] sm:$0xf]
      %v166 = vstv %s145
      %v167 = vrcp.pop %v166
      %v168 = vmul.f32 %v166, %v167
      %v169 = vsub.f32 1.0, %v168
      %v170 = vmul.f32 %v167, %v169
      %v171 = vadd.f32 %v167, %v170
      %vm172 = vweird.f32 %v166
      %vm173 = vweird.f32 %v167
      %vm174 = vmor %vm172, %vm173
      %v175 = vsel %vm174, %v167, %v171
      %v176 = vand.u32 2147483647, %v166
      %vm177 = vcmp.eq.f32.partialorder %v176, 8.507059e+37
      %v178 = vand.u32 %v166, 2147483648
      %v179 = vor.u32 1.1754944e-38, %v178
      %v180 = vsel %vm177, %v179, %v175
      %s181 = vtos %v180
      %v182 = vstv %s181
      %v183 = vmul.f32 %v165, %v182
      %v184 = vadd.f32 %v164, %v183
      %185 = vst.msk [vmem:[#allocation6] sm:$0xf] %vm118, %v184
    $region37: #{tpu_custom_call.1} parent=1 // pred_fallthru
      _
    // Predicated region
    $region38: #{tpu_custom_call.1} parent=1 // pred_check
      _
    $region39: #{tpu_custom_call.1} parent=1 // pred_check_branch
      %187 = sbr.rel (0) target = $region41
    $region40: #{tpu_custom_call.1} parent=1 // pred_region
      %189 = vsyncadd [#allocation5], 0
      %s191 = sshll.u32 [#allocation4], 4
      %s192 = int_to_ptr.vmem [resolvable:$true] %s191
      %s193 = sshll.u32 %s7, 4
      %s194 = int_to_ptr.hbm [resolvable:$true] %s193
      %196 = dma.vmem_to_hbm [thread:$0]  %s192, 64, %s194, [#allocation5]
    $region41: #{tpu_custom_call.1} parent=1 // pred_fallthru
      _
    // Predicated region
    $region42: #{tpu_custom_call.1} parent=1 // pred_check
      _
    $region43: #{tpu_custom_call.1} parent=1 // pred_check_branch
      %198 = sbr.rel (0) target = $region45
    $region44: #{tpu_custom_call.1} parent=1 // pred_region
      %200 = vsyncadd [#allocation7], 0
      %s202 = sshll.u32 [#allocation6], 4
      %s203 = int_to_ptr.vmem [resolvable:$true] %s202
      %s204 = sshll.u32 %s8, 4
      %s205 = int_to_ptr.hbm [resolvable:$true] %s204
      %207 = dma.vmem_to_hbm [thread:$0]  %s203, 64, %s205, [#allocation7]
    $region45: #{tpu_custom_call.1} parent=1 // pred_fallthru
      _
    // Predicated region
    $region46: #{tpu_custom_call.1} parent=1 // pred_check
      _
    $region47: #{tpu_custom_call.1} parent=1 // pred_check_branch
      %209 = sbr.rel (0) target = $region49
    $region48: #{tpu_custom_call.1} parent=1 // pred_region
      %211 = dma.done [#allocation5], 64
    $region49: #{tpu_custom_call.1} parent=1 // pred_fallthru
      _
    // Predicated region
    $region50: #{tpu_custom_call.1} parent=1 // pred_check
      _
    $region51: #{tpu_custom_call.1} parent=1 // pred_check_branch
      %213 = sbr.rel (0) target = $region53
    $region52: #{tpu_custom_call.1} parent=1 // pred_region
      %215 = dma.done [#allocation7], 64
    $region53: #{tpu_custom_call.1} parent=1 // pred_fallthru
      _
    %216 = vsyncpa [#allocation5], 1
    %217 = vsyncpa [#allocation7], 1

</llo_original>
